<compile_context>
chip_gen: v7x
topology: tpu7x:2x2x1
jax: 0.10.0
libtpu: 0.0.40
codegen_flags: <defaults>
</compile_context>

<pallas_src>
import functools

import jax
import jax.numpy as jnp
from jax.experimental import pallas as pl
from jax.experimental.pallas import tpu as pltpu

_VMEM_BUDGET_BYTES = 36 * 1024 * 1024   # x + out double buffers must fit here
_TARGET_TILE_BYTES = 8 * 1024 * 1024    # ~8 MiB per block
_VMEM_LIMIT_BYTES = 48 * 1024 * 1024    # scoped VMEM limit (safe on v5e/v6e/v7x)
_FAST_PATH_BYTES = 256 * 1024           # below this, plain jnp beats launch overhead


def _round_up(n: int, m: int) -> int:
    return ((n + m - 1) // m) * m


def _round_down(n: int, m: int) -> int:
    return (n // m) * m


def _sublane_multiple(dtype) -> int:
    bits = jnp.dtype(dtype).itemsize * 8
    if bits >= 32:
        return 8
    if bits == 16:
        return 16
    return 32


def _kernel_bias(x_ref, wb_ref, o_ref):
    # x_ref: (TB, TF); wb_ref: (2, TF) — row 0 = weight, row 1 = bias.
    o_ref[...] = x_ref[...] * wb_ref[0:1, :] + wb_ref[1:2, :]


def _kernel_nobias(x_ref, w_ref, o_ref):
    # x_ref: (TB, TF); w_ref: (1, TF).
    o_ref[...] = x_ref[...] * w_ref[...]


@functools.partial(jax.jit, static_argnames=("vmem_budget_bytes", "target_tile_bytes"))
def _linear_diag_pallas(x, wb, *, vmem_budget_bytes, target_tile_bytes):
    B, F = x.shape
    dtype = x.dtype
    itemsize = jnp.dtype(dtype).itemsize
    has_bias = wb.shape[0] == 2
    kernel = _kernel_bias if has_bias else _kernel_nobias

    sub = _sublane_multiple(dtype)
    # Per-row VMEM footprint (lane dim pads to a multiple of 128 in VMEM).
    row_bytes = _round_up(F, 128) * itemsize
    # x and out, each double-buffered -> 4 tiles must fit the budget.
    max_tile_bytes = max(vmem_budget_bytes // 4, 1)

    if sub * row_bytes <= max_tile_bytes:
        # ---- Primary path: 1-D grid over batch, full-F blocks ----------------
        eff_target = min(target_tile_bytes, max_tile_bytes)
        tb_cap = max(_round_down(eff_target // row_bytes, sub), sub)
        TB = min(tb_cap, _round_up(B, sub))
        grid = (pl.cdiv(B, TB),)
        x_spec = pl.BlockSpec((TB, F), lambda i: (i, 0))
        wb_spec = pl.BlockSpec((wb.shape[0], F), lambda i: (0, 0))  # VMEM-resident
        out_spec = pl.BlockSpec((TB, F), lambda i: (i, 0))
        dims = ("parallel",)
    else:
        # ---- Fallback for very large F: 2-D grid, feature axis OUTER ---------
        TF = min(1024, _round_up(F, 128))
        TB = max(_round_down(max_tile_bytes // (TF * itemsize), sub), sub)
        TB = min(TB, _round_up(B, sub))
        grid = (pl.cdiv(F, TF), pl.cdiv(B, TB))
        x_spec = pl.BlockSpec((TB, TF), lambda fj, bi: (bi, fj))
        wb_spec = pl.BlockSpec((wb.shape[0], TF), lambda fj, bi: (0, fj))
        out_spec = pl.BlockSpec((TB, TF), lambda fj, bi: (bi, fj))
        dims = ("parallel", "parallel")

    return pl.pallas_call(
        kernel,
        out_shape=jax.ShapeDtypeStruct((B, F), dtype),
        grid=grid,
        in_specs=[x_spec, wb_spec],
        out_specs=out_spec,
        compiler_params=pltpu.CompilerParams(
            dimension_semantics=dims,
            vmem_limit_bytes=_VMEM_LIMIT_BYTES,
        ),
    )(x, wb)


def linear_diag(x, weight, bias=None, *, force_kernel=False,
                vmem_budget_bytes=_VMEM_BUDGET_BYTES,
                target_tile_bytes=_TARGET_TILE_BYTES):
    """Pallas implementation of LinearDiag.forward.

    x:      [B, F]
    weight: [F]
    bias:   [F] or None
    """
    assert x.ndim == 2 and weight.ndim == 1 and x.shape[1] == weight.shape[0]
    if bias is not None:
        assert bias.ndim == 1 and bias.shape[0] == weight.shape[0]

    B, F = x.shape
    dtypes = [x.dtype, weight.dtype] + ([bias.dtype] if bias is not None else [])
    out_dtype = jnp.result_type(*dtypes)

    # Small-input fast path: a single fused XLA elementwise op beats
    # pallas_call launch overhead for tiny shapes.
    if not force_kernel and B * F * jnp.dtype(out_dtype).itemsize <= _FAST_PATH_BYTES:
        out = x.astype(out_dtype) * weight.astype(out_dtype)[None, :]
        if bias is not None:
            out = out + bias.astype(out_dtype)[None, :]
        return out

    x = x.astype(out_dtype)
    if bias is not None:
        wb = jnp.stack(
            [weight.astype(out_dtype), bias.astype(out_dtype)], axis=0)  # (2, F)
    else:
        wb = weight.astype(out_dtype).reshape(1, F)                      # (1, F)

    return _linear_diag_pallas(
        x, wb,
        vmem_budget_bytes=int(vmem_budget_bytes),
        target_tile_bytes=int(target_tile_bytes),
    )


if __name__ == "__main__":
    key = jax.random.PRNGKey(0)

    # Small shapes consistent with the module: batch=8, num_features=32.
    B, num_features = 8, 32

    # Deterministic parameter init exactly as in LinearDiag.__init__:
    #   weight = ones(num_features), bias = zeros(num_features)
    weight = jnp.ones((num_features,), dtype=jnp.float32)
    bias = jnp.zeros((num_features,), dtype=jnp.float32)
    x = jax.random.normal(key, (B, num_features), dtype=jnp.float32)

    # bias=False variant (module default) — tiny shape takes the fast path.
    out_nobias = jax.block_until_ready(linear_diag(x, weight, bias=None))
    # bias=True variant — fast path.
    out_bias = jax.block_until_ready(linear_diag(x, weight, bias=bias))
    # Same small shape but forced through the Pallas kernel (1-D full-F path).
    out_kern = jax.block_until_ready(
        linear_diag(x, weight, bias=bias, force_kernel=True))

    # Larger, non-(8,128)-aligned shape: exercises ragged edge blocks, no padding.
    k1, k2, k3 = jax.random.split(jax.random.PRNGKey(0), 3)
    B2, F2 = 300, 200
    x2 = jax.random.normal(k1, (B2, F2), dtype=jnp.float32)
    w2 = jax.random.normal(k2, (F2,), dtype=jnp.float32)
    b2 = jax.random.normal(k3, (F2,), dtype=jnp.float32)
    out2 = jax.block_until_ready(linear_diag(x2, w2, bias=b2, force_kernel=True))

    # Force the large-F 2-D fallback path (feature-outer grid) with a tiny
    # budget so it is exercised/checked at small shapes.
    out3 = jax.block_until_ready(
        linear_diag(x2, w2, bias=b2, force_kernel=True,
                    vmem_budget_bytes=16 * 1024, target_tile_bytes=16 * 1024))

    # Reference checks against plain JAX semantics of the PyTorch forward.
    ref_nobias = x * weight[None, :]
    ref_bias = x * weight[None, :] + bias[None, :]
    ref2 = x2 * w2[None, :] + b2[None, :]
    assert jnp.allclose(out_nobias, ref_nobias, atol=1e-6)
    assert jnp.allclose(out_bias, ref_bias, atol=1e-6)
    assert jnp.allclose(out_kern, ref_bias, atol=1e-6)
    assert jnp.allclose(out2, ref2, atol=1e-5)
    assert jnp.allclose(out3, ref2, atol=1e-5)

    print("KERNEL_OK")
</pallas_src>

<mosaic_0001>
module attributes {stable_mosaic.version = 11 : i64} {
  func.func @_kernel_bias(%arg0: i32, %arg1: memref<8x32xf32, #tpu.memory_space<vmem>>, %arg2: memref<2x32xf32, #tpu.memory_space<vmem>>, %arg3: memref<8x32xf32, #tpu.memory_space<vmem>>) attributes {dimension_semantics = [#tpu.dimension_semantics<parallel>], iteration_bounds = array<i64: 1>, scalar_prefetch = 0 : i64, scratch_operands = 0 : i64, tpu.core_type = #tpu.core_type<tc>, window_params = [{transform_indices = @transform_0, window_bounds = array<i64: 8, 32>}, {pipeline_mode = #tpu.pipeline_mode<synchronous>, transform_indices = @transform_1, window_bounds = array<i64: 2, 32>}, {transform_indices = @transform_2, window_bounds = array<i64: 8, 32>}]} {
    %c0 = arith.constant 0 : index
    %c0_0 = arith.constant 0 : index
    %0 = vector.load %arg1[%c0, %c0_0] : memref<8x32xf32, #tpu.memory_space<vmem>>, vector<8x32xf32>
    %c0_1 = arith.constant 0 : index
    %c0_2 = arith.constant 0 : index
    %1 = vector.load %arg2[%c0_1, %c0_2] : memref<2x32xf32, #tpu.memory_space<vmem>>, vector<1x32xf32>
    %2 = vector.broadcast %1 : vector<1x32xf32> to vector<8x32xf32>
    %3 = arith.mulf %0, %2 : vector<8x32xf32>
    %c1 = arith.constant 1 : index
    %c0_3 = arith.constant 0 : index
    %4 = vector.load %arg2[%c1, %c0_3] : memref<2x32xf32, #tpu.memory_space<vmem>>, vector<1x32xf32>
    %5 = vector.broadcast %4 : vector<1x32xf32> to vector<8x32xf32>
    %6 = arith.addf %3, %5 : vector<8x32xf32>
    %c0_4 = arith.constant 0 : index
    %c0_5 = arith.constant 0 : index
    %7 = vector.load %arg3[%c0_4, %c0_5] : memref<8x32xf32, #tpu.memory_space<vmem>>, vector<8x32xf32>
    tpu.vector_store %arg3[%c0_4, %c0_5], %6 {strides = array<i32>} : memref<8x32xf32, #tpu.memory_space<vmem>>, vector<8x32xf32>,
    return
  }
  func.func @transform_0(%arg0: i32) -> (i32, i32) {
    %c0_i32 = arith.constant 0 : i32
    %c0_i32_0 = arith.constant 0 : i32
    return %arg0, %c0_i32 : i32, i32
  }
  func.func @transform_1(%arg0: i32) -> (i32, i32) {
    %c0_i32 = arith.constant 0 : i32
    %c0_i32_0 = arith.constant 0 : i32
    %c0_i32_1 = arith.constant 0 : i32
    return %c0_i32, %c0_i32_0 : i32, i32
  }
  func.func @transform_2(%arg0: i32) -> (i32, i32) {
    %c0_i32 = arith.constant 0 : i32
    %c0_i32_0 = arith.constant 0 : i32
    return %arg0, %c0_i32 : i32, i32
  }
}

</mosaic_0001>

<llo_original>
// kernel: _linear_diag_pallas.1
$region0: #{_linear_diag_pallas.1}
  #allocation0 [shape = 'u32[]', space=smem, size = 0x4, offset = 0x4, fixed_abs, tag = 'smem constant byte address 0x4 - core index']
  #allocation1 [shape = 'u32[144,128]{1,0:T(1,128)}', space=vmem, size = 0x12000, scoped, tag = 'internal scratch']
  %s0 = inlined_call_operand.hbm [shape: f32[8,32], index: 0, kind: input, shape index: {}]
  %s1 = inlined_call_operand.vmem [shape: f32[2,32], index: 1, kind: input, shape index: {}]
  %s2 = inlined_call_operand.hbm [shape: f32[8,32], index: 2, kind: output, shape index: {}]
  %s3 = sld [smem:[#allocation0]]
  $region22: #{_linear_diag_pallas.1} parent=0
    _
  %s5 = ssub.s32 1, %s3
  %s6 = scalar_select 0, %s5, %s3
  $region1: #{_linear_diag_pallas.1} parent=0
    #allocation2 [shape = 'u8[4096]{0}', space=vmem, size = 0x1000, scoped, tag = 'input window, operand 0, single buffered']
    #allocation3 [shape = 's32[1]{0}', space=sflag, size = 0x4, scoped, tag = 'scoped memory for _linear_diag_pallas.1']
    #allocation4 [shape = 's32[1]{0}', space=sflag, size = 0x4, scoped, tag = 'scoped memory for _linear_diag_pallas.1']
    #allocation5 [shape = 'u8[4096]{0}', space=vmem, size = 0x1000, scoped, tag = 'output window, operand 0, single buffered']
    %7 = vsyncpa [#allocation3], 0
    %8 = vsyncpa [#allocation4], 0
    // Predicated region
    $region2: #{_linear_diag_pallas.1} parent=1 // pred_check
      _
    $region3: #{_linear_diag_pallas.1} parent=1 // pred_check_branch
      %10 = sbr.rel (0) target = $region5
    $region4: #{_linear_diag_pallas.1} parent=1 // pred_region
      %s12 = ssub.s32 128, 128
      %13 = vsyncadd [#allocation3], %s12
      %s15 = sshll.u32 [#allocation2], 4
      %s16 = int_to_ptr.vmem [resolvable:$true] %s15
      %18 = dma.hbm_to_vmem [thread:$0]  %s0, 128, %s16, [#allocation3]
    $region5: #{_linear_diag_pallas.1} parent=1 // pred_fallthru
      _
    // Predicated region
    $region6: #{_linear_diag_pallas.1} parent=1 // pred_check
      _
    $region7: #{_linear_diag_pallas.1} parent=1 // pred_check_branch
      %20 = sbr.rel (0) target = $region9
    $region8: #{_linear_diag_pallas.1} parent=1 // pred_region
      _
    $region9: #{_linear_diag_pallas.1} parent=1 // pred_fallthru
      _
    // Predicated region
    $region10: #{_linear_diag_pallas.1} parent=1 // pred_check
      _
    $region11: #{_linear_diag_pallas.1} parent=1 // pred_check_branch
      %22 = sbr.rel (0) target = $region13
    $region12: #{_linear_diag_pallas.1} parent=1 // pred_region
      %23 = dma.done [#allocation3], 128
    $region13: #{_linear_diag_pallas.1} parent=1 // pred_fallthru
      _
    %v24 = vld [vmem:[#allocation2] sm:$0xff]
    %v25 = vld [vmem:[%s1] sm:$0x1]
    %v26 = vlaneseq
    %v27 = vshrl.u32 %v26, 7
    %v28 = vsub.s32 0, %v27
    %v29 = vrot.slane %v25, %v28
    %v30 = vmul.f32 %v24, %v29
    %v31 = vld [vmem:[%s1 + $0x1] sm:$0x1]
    %v32 = vlaneseq
    %v33 = vshrl.u32 %v32, 7
    %v34 = vsub.s32 0, %v33
    %v35 = vrot.slane %v31, %v34
    %v36 = vadd.f32 %v30, %v35
    %vm37 = vcmask 261120
    %38 = vst.msk [vmem:[#allocation5] sm:$0xff] %vm37, %v36
    // Predicated region
    $region14: #{_linear_diag_pallas.1} parent=1 // pred_check
      _
    $region15: #{_linear_diag_pallas.1} parent=1 // pred_check_branch
      %40 = sbr.rel (0) target = $region17
    $region16: #{_linear_diag_pallas.1} parent=1 // pred_region
      %s42 = ssub.s32 128, 128
      %43 = vsyncadd [#allocation4], %s42
      %s45 = sshll.u32 [#allocation5], 4
      %s46 = int_to_ptr.vmem [resolvable:$true] %s45
      %48 = dma.vmem_to_hbm [thread:$0]  %s46, 128, %s2, [#allocation4]
    $region17: #{_linear_diag_pallas.1} parent=1 // pred_fallthru
      _
    // Predicated region
    $region18: #{_linear_diag_pallas.1} parent=1 // pred_check
      _
    $region19: #{_linear_diag_pallas.1} parent=1 // pred_check_branch
      %50 = sbr.rel (0) target = $region21
    $region20: #{_linear_diag_pallas.1} parent=1 // pred_region
      %51 = dma.done [#allocation4], 128
    $region21: #{_linear_diag_pallas.1} parent=1 // pred_fallthru
      _
    %52 = vsyncpa [#allocation3], 1
    %53 = vsyncpa [#allocation4], 1

</llo_original>
